<compile_context>
chip_gen: v7x
topology: tpu7x:2x2x1
jax: 0.10.0
libtpu: 0.0.40
codegen_flags: <defaults>
</compile_context>

<pallas_src>
import functools
import math

import jax
import jax.numpy as jnp
from jax.experimental import pallas as pl
from jax.experimental.pallas import tpu as pltpu


def _round_up(x, m):
    return ((x + m - 1) // m) * m


# --------------------------------------------------------------------------
# Kernel 1: fused projection  P = x @ [W_self | W_neigh] + bias_row
# emitted as P_self (f32) and P_neigh (bf16); bias_row also plants the 1.0
# "degree lane" in the last padded column of P_neigh.
# --------------------------------------------------------------------------
def _proj_kernel(x_ref, w_ref, b_ref, ps_ref, pn_ref):
    p = (jnp.dot(x_ref[...], w_ref[...], preferred_element_type=jnp.float32)
         + b_ref[...])
    f_pad = ps_ref.shape[-1]
    ps_ref[...] = p[:, :f_pad]
    pn_ref[...] = p[:, f_pad:].astype(jnp.bfloat16)


# --------------------------------------------------------------------------
# Kernel 2: tiled aggregation  acc += A_tile @ P_neigh_tile  (bf16 x bf16 MXU,
# f32 accumulate).  Epilogue (last k): degree from the ones lane, then
# out = relu(P_self + acc * (1/deg)).
# --------------------------------------------------------------------------
def _agg_kernel(a_ref, pn_ref, ps_ref, o_ref, acc_ref, *, pn_resident, tk):
    k = pl.program_id(1)

    @pl.when(k == 0)
    def _():
        acc_ref[...] = jnp.zeros_like(acc_ref)

    if pn_resident:
        # Whole P_neigh lives in VMEM; slice the k-th row block in-kernel.
        start = pl.multiple_of(k * tk, tk)
        pn = pn_ref[pl.ds(start, tk), :]
    else:
        pn = pn_ref[...]

    acc_ref[...] += jnp.dot(a_ref[...], pn, preferred_element_type=jnp.float32)

    @pl.when(k == pl.num_programs(1) - 1)
    def _():
        acc = acc_ref[...]
        deg = jnp.maximum(acc[:, -1:], 1.0)          # row degree (ones lane)
        inv = pl.reciprocal(deg, approx=False)       # exact
        out = ps_ref[...] + acc * inv                # padded lanes sliced later
        o_ref[...] = jnp.maximum(out, 0.0)           # relu_()


def sage_forward(adj, feat, w_self, w_neigh, bias, *,
                 tm=512, tk=512, pn_resident_bytes=2 * 1024 * 1024):
    """adj: (N,N) 0/1, feat: (N,Fin), w_*: (Fin,Fout), bias: (Fout,) -> (N,Fout).

    tm/tk: row / neighbor tile sizes (clamped for small graphs).  Pass `adj`
    already padded to (n_pad, n_pad) in bf16 to skip the host-side pad/cast.
    """
    n, f_in = feat.shape
    f_out = w_self.shape[1]

    # Lane-dense padded width; "+1" guarantees a spare lane for the degree.
    f_pad = _round_up(f_out + 1, 128)

    # Clamp tiles for small graphs, then pad N to a common multiple of both
    # tile sizes (avoids under-coverage when tm != tk).
    n_min = _round_up(n, 128)
    tm = min(tm, n_min)
    tk = min(tk, n_min)
    n_pad = _round_up(n, math.lcm(tm, tk))

    # ---- operand packing (zeros are semantically inert) --------------------
    feat_p = feat.astype(jnp.float32)
    if n_pad != n:
        feat_p = jnp.zeros((n_pad, f_in), jnp.float32).at[:n, :].set(feat_p)

    w_cat = jnp.zeros((f_in, 2 * f_pad), jnp.float32)
    w_cat = w_cat.at[:, :f_out].set(w_self.astype(jnp.float32))
    w_cat = w_cat.at[:, f_pad:f_pad + f_out].set(w_neigh.astype(jnp.float32))

    bias_row = jnp.zeros((1, 2 * f_pad), jnp.float32)
    bias_row = bias_row.at[0, :f_out].set(bias.astype(jnp.float32))
    bias_row = bias_row.at[0, 2 * f_pad - 1].set(1.0)   # degree lane of P_neigh

    # Adjacency streamed as bf16 (exact for 0/1 edges).  Only pad/cast when the
    # caller did not already provide it in the compact padded form.
    if adj.shape == (n_pad, n_pad) and adj.dtype == jnp.bfloat16:
        adj_p = adj
    else:
        # NOTE: lossy for weighted (non-0/1) adjacency.
        adj_p = jnp.zeros((n_pad, n_pad), jnp.bfloat16).at[:n, :n].set(
            adj.astype(jnp.bfloat16))

    # ---- kernel 1: P_self (f32), P_neigh (bf16) -----------------------------
    p_self, p_neigh = pl.pallas_call(
        _proj_kernel,
        out_shape=(jax.ShapeDtypeStruct((n_pad, f_pad), jnp.float32),
                   jax.ShapeDtypeStruct((n_pad, f_pad), jnp.bfloat16)),
        grid=(n_pad // tm,),
        in_specs=[
            pl.BlockSpec((tm, f_in), lambda i: (i, 0)),
            pl.BlockSpec((f_in, 2 * f_pad), lambda i: (0, 0)),
            pl.BlockSpec((1, 2 * f_pad), lambda i: (0, 0)),
        ],
        out_specs=(pl.BlockSpec((tm, f_pad), lambda i: (i, 0)),
                   pl.BlockSpec((tm, f_pad), lambda i: (i, 0))),
        compiler_params=pltpu.CompilerParams(dimension_semantics=("parallel",)),
    )(feat_p, w_cat, bias_row)

    # ---- kernel 2: tiled A @ P_neigh, 1/deg scale, + P_self, ReLU -----------
    pn_resident = (n_pad * f_pad * 2) <= pn_resident_bytes
    if pn_resident:
        pn_spec = pl.BlockSpec((n_pad, f_pad), lambda i, k: (0, 0))
        pn_buf_rows = n_pad
    else:
        pn_spec = pl.BlockSpec((tk, f_pad), lambda i, k: (k, 0))
        pn_buf_rows = tk

    # Double-buffered inputs/outputs + f32 accumulator; raise the scoped VMEM
    # limit only when this tile budget actually needs more than the default.
    est_vmem = (2 * tm * tk * 2                    # A tiles (bf16)
                + 2 * pn_buf_rows * f_pad * 2      # P_neigh (bf16)
                + 2 * tm * f_pad * 4               # P_self tiles (f32)
                + 2 * tm * f_pad * 4               # output tiles (f32)
                + tm * f_pad * 4)                  # accumulator scratch
    vmem_limit = (int(est_vmem * 1.5)
                  if est_vmem * 1.5 > 14 * 1024 * 1024 else None)

    out_full = pl.pallas_call(
        functools.partial(_agg_kernel, pn_resident=pn_resident, tk=tk),
        out_shape=jax.ShapeDtypeStruct((n_pad, f_pad), jnp.float32),
        grid=(n_pad // tm, n_pad // tk),
        in_specs=[
            pl.BlockSpec((tm, tk), lambda i, k: (i, k)),       # A tile
            pn_spec,                                           # P_neigh
            pl.BlockSpec((tm, f_pad), lambda i, k: (i, 0)),    # P_self (i-rows)
        ],
        out_specs=pl.BlockSpec((tm, f_pad), lambda i, k: (i, 0)),
        scratch_shapes=[pltpu.VMEM((tm, f_pad), jnp.float32)],
        compiler_params=pltpu.CompilerParams(
            dimension_semantics=("parallel", "arbitrary"),
            vmem_limit_bytes=vmem_limit),
    )(adj_p, p_neigh, p_self)

    return out_full[:n, :f_out]


def _reference(adj, feat, w_self, w_neigh, bias):
    adj = adj.astype(jnp.float32)
    deg = jnp.maximum(adj.sum(axis=-1, keepdims=True), 1.0)
    h_neigh = (adj @ feat) / deg
    return jax.nn.relu(feat @ w_self + h_neigh @ w_neigh + bias)


if __name__ == "__main__":
    key = jax.random.PRNGKey(0)

    def make_case(k, n, f_in, f_out):
        k_adj, k_x, k_ws, k_wn, k_b = jax.random.split(k, 5)
        # random directed graph as dense 0/1 adjacency, already in bf16 (exact)
        adj = (jax.random.uniform(k_adj, (n, n)) < 0.3).astype(jnp.bfloat16)
        feat = jax.random.normal(k_x, (n, f_in), dtype=jnp.float32)
        w_self = jax.random.normal(k_ws, (f_in, f_out), dtype=jnp.float32) * 0.1
        w_neigh = jax.random.normal(k_wn, (f_in, f_out), dtype=jnp.float32) * 0.1
        bias = jax.random.normal(k_b, (f_out,), dtype=jnp.float32) * 0.1
        return adj, feat, w_self, w_neigh, bias

    k1, k2 = jax.random.split(key)

    # Case 1: the module's nominal small shapes (N=16, in_feats=32, out_feats=32).
    adj, feat, w_self, w_neigh, bias = make_case(k1, 16, 32, 32)
    out = jax.block_until_ready(sage_forward(adj, feat, w_self, w_neigh, bias))
    ref = _reference(adj, feat, w_self, w_neigh, bias)
    assert out.shape == (16, 32)
    # bf16 P_neigh => mixed-precision aggregation; ~1e-3 relative vs pure f32.
    assert jnp.allclose(out, ref, atol=2e-2, rtol=2e-2), float(
        jnp.max(jnp.abs(out - ref)))

    # Case 2: ragged N, multi-tile grid; exercise both resident-P_neigh and
    # per-k-tiled P_neigh paths of the aggregation kernel.
    adj2, feat2, w_self2, w_neigh2, bias2 = make_case(k2, 300, 48, 40)
    ref2 = _reference(adj2, feat2, w_self2, w_neigh2, bias2)
    for pn_budget in (2 * 1024 * 1024, 0):
        out2 = jax.block_until_ready(
            sage_forward(adj2, feat2, w_self2, w_neigh2, bias2,
                         tm=128, tk=128, pn_resident_bytes=pn_budget))
        assert out2.shape == (300, 40)
        assert jnp.allclose(out2, ref2, atol=2e-2, rtol=2e-2), float(
            jnp.max(jnp.abs(out2 - ref2)))

    print("KERNEL_OK")
</pallas_src>

<mosaic_0001>
module attributes {stable_mosaic.version = 11 : i64} {
  func.func @_proj_kernel(%arg0: i32, %arg1: memref<128x32xf32, #tpu.memory_space<vmem>>, %arg2: memref<32x256xf32, #tpu.memory_space<vmem>>, %arg3: memref<1x256xf32, #tpu.memory_space<vmem>>, %arg4: memref<128x128xf32, #tpu.memory_space<vmem>>, %arg5: memref<128x128xbf16, #tpu.memory_space<vmem>>) attributes {dimension_semantics = [#tpu.dimension_semantics<parallel>], iteration_bounds = array<i64: 1>, scalar_prefetch = 0 : i64, scratch_operands = 0 : i64, tpu.core_type = #tpu.core_type<tc>, window_params = [{transform_indices = @transform_0, window_bounds = array<i64: 128, 32>}, {pipeline_mode = #tpu.pipeline_mode<synchronous>, transform_indices = @transform_1, window_bounds = array<i64: 32, 256>}, {pipeline_mode = #tpu.pipeline_mode<synchronous>, transform_indices = @transform_2, window_bounds = array<i64: 1, 256>}, {transform_indices = @transform_3, window_bounds = array<i64: 128, 128>}, {transform_indices = @transform_4, window_bounds = array<i64: 128, 128>}]} {
    %c0 = arith.constant 0 : index
    %c0_0 = arith.constant 0 : index
    %0 = vector.load %arg1[%c0, %c0_0] : memref<128x32xf32, #tpu.memory_space<vmem>>, vector<128x32xf32>
    %c0_1 = arith.constant 0 : index
    %c0_2 = arith.constant 0 : index
    %1 = vector.load %arg2[%c0_1, %c0_2] : memref<32x256xf32, #tpu.memory_space<vmem>>, vector<32x256xf32>
    %cst = arith.constant dense<0.000000e+00> : vector<128x256xf32>
    %2 = tpu.matmul %0, %1, %cst {dimension_numbers = #tpu.dot_dimension_numbers<[1], [0], [0], [1], [0, 0, 1, 1], [], []>} : vector<128x32xf32>, vector<32x256xf32>, vector<128x256xf32> -> vector<128x256xf32>
    %c0_3 = arith.constant 0 : index
    %c0_4 = arith.constant 0 : index
    %3 = vector.load %arg3[%c0_3, %c0_4] : memref<1x256xf32, #tpu.memory_space<vmem>>, vector<1x256xf32>
    %4 = vector.broadcast %3 : vector<1x256xf32> to vector<128x256xf32>
    %5 = arith.addf %2, %4 : vector<128x256xf32>
    %6 = vector.extract_strided_slice %5 {offsets = [0, 0], sizes = [128, 128], strides = [1, 1]} : vector<128x256xf32> to vector<128x128xf32>
    %c0_5 = arith.constant 0 : index
    %c0_6 = arith.constant 0 : index
    %7 = vector.load %arg4[%c0_5, %c0_6] : memref<128x128xf32, #tpu.memory_space<vmem>>, vector<128x128xf32>
    tpu.vector_store %arg4[%c0_5, %c0_6], %6 {strides = array<i32>} : memref<128x128xf32, #tpu.memory_space<vmem>>, vector<128x128xf32>,
    %8 = vector.extract_strided_slice %5 {offsets = [0, 128], sizes = [128, 128], strides = [1, 1]} : vector<128x256xf32> to vector<128x128xf32>
    %9 = arith.truncf %8 : vector<128x128xf32> to vector<128x128xbf16>
    %c0_7 = arith.constant 0 : index
    %c0_8 = arith.constant 0 : index
    %10 = vector.load %arg5[%c0_7, %c0_8] : memref<128x128xbf16, #tpu.memory_space<vmem>>, vector<128x128xbf16>
    tpu.vector_store %arg5[%c0_7, %c0_8], %9 {strides = array<i32>} : memref<128x128xbf16, #tpu.memory_space<vmem>>, vector<128x128xbf16>,
    return
  }
  func.func @transform_0(%arg0: i32) -> (i32, i32) {
    %c0_i32 = arith.constant 0 : i32
    %c0_i32_0 = arith.constant 0 : i32
    return %arg0, %c0_i32 : i32, i32
  }
  func.func @transform_1(%arg0: i32) -> (i32, i32) {
    %c0_i32 = arith.constant 0 : i32
    %c0_i32_0 = arith.constant 0 : i32
    %c0_i32_1 = arith.constant 0 : i32
    return %c0_i32, %c0_i32_0 : i32, i32
  }
  func.func @transform_2(%arg0: i32) -> (i32, i32) {
    %c0_i32 = arith.constant 0 : i32
    %c0_i32_0 = arith.constant 0 : i32
    %c0_i32_1 = arith.constant 0 : i32
    return %c0_i32, %c0_i32_0 : i32, i32
  }
  func.func @transform_3(%arg0: i32) -> (i32, i32) {
    %c0_i32 = arith.constant 0 : i32
    %c0_i32_0 = arith.constant 0 : i32
    return %arg0, %c0_i32 : i32, i32
  }
  func.func @transform_4(%arg0: i32) -> (i32, i32) {
    %c0_i32 = arith.constant 0 : i32
    %c0_i32_0 = arith.constant 0 : i32
    return %arg0, %c0_i32 : i32, i32
  }
}

</mosaic_0001>

<llo_original>
// kernel: tpu_custom_call.1
$region0: #{tpu_custom_call.1}
  #allocation0 [shape = 'u32[]', space=smem, size = 0x4, offset = 0x4, fixed_abs, tag = 'smem constant byte address 0x4 - core index']
  #allocation1 [shape = 'u32[144,128]{1,0:T(1,128)}', space=vmem, size = 0x12000, scoped, tag = 'internal scratch']
  %s0 = inlined_call_operand.vmem [shape: f32[128,32], index: 0, kind: input, shape index: {}]
  %s1 = inlined_call_operand.vmem [shape: f32[32,256], index: 1, kind: input, shape index: {}]
  %s2 = inlined_call_operand.vmem [shape: f32[1,256], index: 2, kind: input, shape index: {}]
  %s3 = inlined_call_operand.hbm [shape: f32[128,128], index: 3, kind: output, shape index: {0}]
  %s4 = inlined_call_operand.hbm [shape: bf16[128,128], index: 4, kind: output, shape index: {1}]
  %5 = xla_tuple %s3, %s4
  %s6 = sld [smem:[#allocation0]]
  $region30: #{tpu_custom_call.1} parent=0
    _
  %s8 = ssub.s32 1, %s6
  %s9 = scalar_select 0, %s8, %s6
  $region1: #{tpu_custom_call.1} parent=0
    #allocation2 [shape = 'u8[65536]{0}', space=vmem, size = 0x10000, scoped, tag = 'output window, operand 0, single buffered']
    #allocation3 [shape = 's32[1]{0}', space=sflag, size = 0x4, scoped, tag = 'scoped memory for tpu_custom_call.1']
    #allocation4 [shape = 'u8[32768]{0}', space=vmem, size = 0x8000, scoped, tag = 'output window, operand 1, single buffered']
    #allocation5 [shape = 's32[1]{0}', space=sflag, size = 0x4, scoped, tag = 'scoped memory for tpu_custom_call.1']
    %10 = vsyncpa [#allocation3], 0
    %11 = vsyncpa [#allocation5], 0
    // Predicated region
    $region2: #{tpu_custom_call.1} parent=1 // pred_check
      _
    $region3: #{tpu_custom_call.1} parent=1 // pred_check_branch
      %13 = sbr.rel (0) target = $region5
    $region4: #{tpu_custom_call.1} parent=1 // pred_region
      _
    $region5: #{tpu_custom_call.1} parent=1 // pred_fallthru
      _
    // Predicated region
    $region6: #{tpu_custom_call.1} parent=1 // pred_check
      _
    $region7: #{tpu_custom_call.1} parent=1 // pred_check_branch
      %15 = sbr.rel (0) target = $region9
    $region8: #{tpu_custom_call.1} parent=1 // pred_region
      _
    $region9: #{tpu_custom_call.1} parent=1 // pred_fallthru
      _
    // Predicated region
    $region10: #{tpu_custom_call.1} parent=1 // pred_check
      _
    $region11: #{tpu_custom_call.1} parent=1 // pred_check_branch
      %17 = sbr.rel (0) target = $region13
    $region12: #{tpu_custom_call.1} parent=1 // pred_region
      _
    $region13: #{tpu_custom_call.1} parent=1 // pred_fallthru
      _
    %v18 = vld [vmem:[%s0] sm:$0xff]
    %v19 = vld [vmem:[%s0 + $0x8] sm:$0xff]
    %v20 = vld [vmem:[%s0 + $0x10] sm:$0xff]
    %v21 = vld [vmem:[%s0 + $0x18] sm:$0xff]
    %v22 = vld [vmem:[%s0 + $0x20] sm:$0xff]
    %v23 = vld [vmem:[%s0 + $0x28] sm:$0xff]
    %v24 = vld [vmem:[%s0 + $0x30] sm:$0xff]
    %v25 = vld [vmem:[%s0 + $0x38] sm:$0xff]
    %v26 = vld [vmem:[%s0 + $0x40] sm:$0xff]
    %v27 = vld [vmem:[%s0 + $0x48] sm:$0xff]
    %v28 = vld [vmem:[%s0 + $0x50] sm:$0xff]
    %v29 = vld [vmem:[%s0 + $0x58] sm:$0xff]
    %v30 = vld [vmem:[%s0 + $0x60] sm:$0xff]
    %v31 = vld [vmem:[%s0 + $0x68] sm:$0xff]
    %v32 = vld [vmem:[%s0 + $0x70] sm:$0xff]
    %v33 = vld [vmem:[%s0 + $0x78] sm:$0xff]
    %v34 = vld [vmem:[%s1] sm:$0xff]
    %v35 = vld [vmem:[%s1 + $0x8] sm:$0xff]
    %v36 = vld [vmem:[%s1 + $0x10] sm:$0xff]
    %v37 = vld [vmem:[%s1 + $0x18] sm:$0xff]
    %v38 = vld [vmem:[%s1 + $0x20] sm:$0xff]
    %v39 = vld [vmem:[%s1 + $0x28] sm:$0xff]
    %v40 = vld [vmem:[%s1 + $0x30] sm:$0xff]
    %v41 = vld [vmem:[%s1 + $0x38] sm:$0xff]
    %v42 = vld [vmem:[%s2] sm:$0x3]
    %v44 = vlaneseq
    %v45 = vshrl.u32 %v44, 7
    %v46 = vsub.s32 0, %v45
    %v47 = vrot.slane %v42, %v46
    %v48 = vlaneseq
    %v49 = vshrl.u32 %v48, 7
    %v50 = vsub.s32 1, %v49
    %v51 = vrot.slane %v42, %v50
    %vm54 = vcmask 261120
    %v56 = vsel %vm54, %v18, 0
    %v59 = vsel %vm54, %v19, 0
    %v62 = vsel %vm54, %v20, 0
    %v65 = vsel %vm54, %v21, 0
    %v68 = vsel %vm54, %v22, 0
    %v71 = vsel %vm54, %v23, 0
    %v74 = vsel %vm54, %v24, 0
    %v77 = vsel %vm54, %v25, 0
    %v80 = vsel %vm54, %v26, 0
    %v83 = vsel %vm54, %v27, 0
    %v86 = vsel %vm54, %v28, 0
    %v89 = vsel %vm54, %v29, 0
    %v92 = vsel %vm54, %v30, 0
    %v95 = vsel %vm54, %v31, 0
    %v98 = vsel %vm54, %v32, 0
    %v101 = vsel %vm54, %v33, 0
    %103 = vmatprep.subr.mxu0 %v35
    %104 = vmatpush1.msra.mxu0 %v34
    %105 = vmatprep.subr.mxu0 %v37
    %106 = vmatpush1.msra.mxu0 %v36
    %107 = vmatprep.subr.mxu0 %v39
    %108 = vmatpush1.msra.mxu0 %v38
    %109 = vmatprep.subr.mxu0 %v41
    %110 = vmatpush1.msra.mxu0 %v40
    %111 = vmatprep.subr.mxu0 0.0
    %112 = vmatpush1.msra.mxu0 0.0
    %113 = vmatprep.subr.mxu0 0.0
    %114 = vmatpush1.msra.mxu0 0.0
    %115 = vmatprep.subr.mxu0 0.0
    %116 = vmatpush1.msra.mxu0 0.0
    %117 = vmatprep.subr.mxu0 0.0
    %118 = vmatpush1.msra.mxu0 0.0
    %119 = vmatprep.subr.mxu0 0.0
    %120 = vmatpush1.msra.mxu0 0.0
    %121 = vmatprep.subr.mxu0 0.0
    %122 = vmatpush1.msra.mxu0 0.0
    %123 = vmatprep.subr.mxu0 0.0
    %124 = vmatpush1.msra.mxu0 0.0
    %125 = vmatprep.subr.mxu0 0.0
    %126 = vmatpush1.msra.mxu0 0.0
    %127 = vmatprep.subr.mxu0 0.0
    %128 = vmatpush1.msra.mxu0 0.0
    %129 = vmatprep.subr.mxu0 0.0
    %130 = vmatpush1.msra.mxu0 0.0
    %131 = vmatprep.subr.mxu0 0.0
    %132 = vmatpush1.msra.mxu0 0.0
    %133 = vmatprep.subr.mxu0 0.0
    %134 = vmatpush1.msra.mxu0 0.0
    %135 = vmatprep.subr.mxu0 0.0
    %136 = vmatpush1.msra.mxu0 0.0
    %137 = vmatprep.subr.mxu0 0.0
    %138 = vmatpush1.msra.mxu0 0.0
    %139 = vmatprep.subr.mxu0 0.0
    %140 = vmatpush1.msra.mxu0 0.0
    %141 = vmatprep.subr.mxu0 0.0
    %142 = vmatpush1.msra.mxu0 0.0
    %143 = vmatprep.subr.mxu0 0.0
    %144 = vmatpush1.msra.mxu0 0.0
    %145 = vmatprep.subr.mxu0 0.0
    %146 = vmatpush1.msra.mxu0 0.0
    %147 = vmatprep.subr.mxu0 0.0
    %148 = vmatpush1.msra.mxu0 0.0
    %149 = vmatprep.subr.mxu0 0.0
    %150 = vmatpush1.msra.mxu0 0.0
    %151 = vmatprep.subr.mxu0 0.0
    %152 = vmatpush1.msra.mxu0 0.0
    %153 = vmatprep.subr.mxu0 0.0
    %154 = vmatpush1.msra.mxu0 0.0
    %155 = vmatprep.subr.mxu0 0.0
    %156 = vmatpush1.msra.mxu0 0.0
    %157 = vmatprep.subr.mxu0 0.0
    %158 = vmatpush1.msra.mxu0 0.0
    %159 = vmatprep.subr.mxu0 0.0
    %160 = vmatpush1.msra.mxu0 0.0
    %161 = vmatprep.subr.mxu0 0.0
    %162 = vmatpush1.msra.mxu0 0.0
    %163 = vmatprep.subr.mxu0 0.0
    %164 = vmatpush1.msra.mxu0 0.0
    %165 = vmatprep.subr.mxu0 0.0
    %166 = vmatpush1.msra.mxu0 0.0
    %167 = vmatprep.mubr.f32.mxu0 0.0
    %168 = vmatmul.mubr.f32.gmra.mrb[0].mxu0 %v56
    %v169 = vpop.f32.mrb[0].mxu0
    %v170 = vadd.f32 %v47, %v169
    %v171 = vpop.f32.mrb[0].mxu0
    %v172 = vadd.f32 %v51, %v171
    %173 = vmatprep.mubr.f32.mxu0 0.0
    %174 = vmatmul.mubr.f32.gmra.mrb[0].mxu0 %v59
    %v175 = vpop.f32.mrb[0].mxu0
    %v176 = vadd.f32 %v47, %v175
    %v177 = vpop.f32.mrb[0].mxu0
    %v178 = vadd.f32 %v51, %v177
    %179 = vmatprep.mubr.f32.mxu0 0.0
    %180 = vmatmul.mubr.f32.gmra.mrb[0].mxu0 %v62
    %v181 = vpop.f32.mrb[0].mxu0
    %v182 = vadd.f32 %v47, %v181
    %v183 = vpop.f32.mrb[0].mxu0
    %v184 = vadd.f32 %v51, %v183
    %185 = vmatprep.mubr.f32.mxu0 0.0
    %186 = vmatmul.mubr.f32.gmra.mrb[0].mxu0 %v65
    %v187 = vpop.f32.mrb[0].mxu0
    %v188 = vadd.f32 %v47, %v187
    %v189 = vpop.f32.mrb[0].mxu0
    %v190 = vadd.f32 %v51, %v189
    %191 = vmatprep.mubr.f32.mxu0 0.0
    %192 = vmatmul.mubr.f32.gmra.mrb[0].mxu0 %v68
    %v193 = vpop.f32.mrb[0].mxu0
    %v194 = vadd.f32 %v47, %v193
    %v195 = vpop.f32.mrb[0].mxu0
    %v196 = vadd.f32 %v51, %v195
    %197 = vmatprep.mubr.f32.mxu0 0.0
    %198 = vmatmul.mubr.f32.gmra.mrb[0].mxu0 %v71
    %v199 = vpop.f32.mrb[0].mxu0
    %v200 = vadd.f32 %v47, %v199
    %v201 = vpop.f32.mrb[0].mxu0
    %v202 = vadd.f32 %v51, %v201
    %203 = vmatprep.mubr.f32.mxu0 0.0
    %204 = vmatmul.mubr.f32.gmra.mrb[0].mxu0 %v74
    %v205 = vpop.f32.mrb[0].mxu0
    %v206 = vadd.f32 %v47, %v205
    %v207 = vpop.f32.mrb[0].mxu0
    %v208 = vadd.f32 %v51, %v207
    %209 = vmatprep.mubr.f32.mxu0 0.0
    %210 = vmatmul.mubr.f32.gmra.mrb[0].mxu0 %v77
    %v211 = vpop.f32.mrb[0].mxu0
    %v212 = vadd.f32 %v47, %v211
    %v213 = vpop.f32.mrb[0].mxu0
    %v214 = vadd.f32 %v51, %v213
    %215 = vmatprep.mubr.f32.mxu0 0.0
    %216 = vmatmul.mubr.f32.gmra.mrb[0].mxu0 %v80
    %v217 = vpop.f32.mrb[0].mxu0
    %v218 = vadd.f32 %v47, %v217
    %v219 = vpop.f32.mrb[0].mxu0
    %v220 = vadd.f32 %v51, %v219
    %221 = vmatprep.mubr.f32.mxu0 0.0
    %222 = vmatmul.mubr.f32.gmra.mrb[0].mxu0 %v83
    %v223 = vpop.f32.mrb[0].mxu0
    %v224 = vadd.f32 %v47, %v223
    %v225 = vpop.f32.mrb[0].mxu0
    %v226 = vadd.f32 %v51, %v225
    %227 = vmatprep.mubr.f32.mxu0 0.0
    %228 = vmatmul.mubr.f32.gmra.mrb[0].mxu0 %v86
    %v229 = vpop.f32.mrb[0].mxu0
    %v230 = vadd.f32 %v47, %v229
    %v231 = vpop.f32.mrb[0].mxu0
    %v232 = vadd.f32 %v51, %v231
    %233 = vmatprep.mubr.f32.mxu0 0.0
    %234 = vmatmul.mubr.f32.gmra.mrb[0].mxu0 %v89
    %v235 = vpop.f32.mrb[0].mxu0
    %v236 = vadd.f32 %v47, %v235
    %v237 = vpop.f32.mrb[0].mxu0
    %v238 = vadd.f32 %v51, %v237
    %239 = vmatprep.mubr.f32.mxu0 0.0
    %240 = vmatmul.mubr.f32.gmra.mrb[0].mxu0 %v92
    %v241 = vpop.f32.mrb[0].mxu0
    %v242 = vadd.f32 %v47, %v241
    %v243 = vpop.f32.mrb[0].mxu0
    %v244 = vadd.f32 %v51, %v243
    %245 = vmatprep.mubr.f32.mxu0 0.0
    %246 = vmatmul.mubr.f32.gmra.mrb[0].mxu0 %v95
    %v247 = vpop.f32.mrb[0].mxu0
    %v248 = vadd.f32 %v47, %v247
    %v249 = vpop.f32.mrb[0].mxu0
    %v250 = vadd.f32 %v51, %v249
    %251 = vmatprep.mubr.f32.mxu0 0.0
    %252 = vmatmul.mubr.f32.gmra.mrb[0].mxu0 %v98
    %v253 = vpop.f32.mrb[0].mxu0
    %v254 = vadd.f32 %v47, %v253
    %v255 = vpop.f32.mrb[0].mxu0
    %v256 = vadd.f32 %v51, %v255
    %257 = vmatprep.mubr.f32.mxu0 0.0
    %258 = vmatmul.mubr.f32.gmra.mrb[0].mxu0 %v101
    %v259 = vpop.f32.mrb[0].mxu0
    %v260 = vadd.f32 %v47, %v259
    %v261 = vpop.f32.mrb[0].mxu0
    %v262 = vadd.f32 %v51, %v261
    %263 = vdwg.mxu0
    %264 = vst [vmem:[#allocation2] sm:$0xff] %v170
    %265 = vst [vmem:[#allocation2 + $0x8] sm:$0xff] %v176
    %266 = vst [vmem:[#allocation2 + $0x10] sm:$0xff] %v182
    %267 = vst [vmem:[#allocation2 + $0x18] sm:$0xff] %v188
    %268 = vst [vmem:[#allocation2 + $0x20] sm:$0xff] %v194
    %269 = vst [vmem:[#allocation2 + $0x28] sm:$0xff] %v200
    %270 = vst [vmem:[#allocation2 + $0x30] sm:$0xff] %v206
    %271 = vst [vmem:[#allocation2 + $0x38] sm:$0xff] %v212
    %272 = vst [vmem:[#allocation2 + $0x40] sm:$0xff] %v218
    %273 = vst [vmem:[#allocation2 + $0x48] sm:$0xff] %v224
    %274 = vst [vmem:[#allocation2 + $0x50] sm:$0xff] %v230
    %275 = vst [vmem:[#allocation2 + $0x58] sm:$0xff] %v236
    %276 = vst [vmem:[#allocation2 + $0x60] sm:$0xff] %v242
    %277 = vst [vmem:[#allocation2 + $0x68] sm:$0xff] %v248
    %278 = vst [vmem:[#allocation2 + $0x70] sm:$0xff] %v254
    %279 = vst [vmem:[#allocation2 + $0x78] sm:$0xff] %v260
    %v280 = vpack.c.bf16 %v178, %v172
    %v281 = vpack.c.bf16 %v190, %v184
    %v282 = vpack.c.bf16 %v202, %v196
    %v283 = vpack.c.bf16 %v214, %v208
    %v284 = vpack.c.bf16 %v226, %v220
    %v285 = vpack.c.bf16 %v238, %v232
    %v286 = vpack.c.bf16 %v250, %v244
    %v287 = vpack.c.bf16 %v262, %v256
    %v296 = vunpack.c.l.b16 %v280
    %v297 = vunpack.c.h.b16 %v280
    %v298 = vunpack.c.l.b16 %v281
    %v299 = vunpack.c.h.b16 %v281
    %v300 = vunpack.c.l.b16 %v282
    %v301 = vunpack.c.h.b16 %v282
    %v302 = vunpack.c.l.b16 %v283
    %v303 = vunpack.c.h.b16 %v283
    %v304 = vunpack.c.l.b16 %v284
    %v305 = vunpack.c.h.b16 %v284
    %v306 = vunpack.c.l.b16 %v285
    %v307 = vunpack.c.h.b16 %v285
    %v308 = vunpack.c.l.b16 %v286
    %v309 = vunpack.c.h.b16 %v286
    %v310 = vunpack.c.l.b16 %v287
    %v311 = vunpack.c.h.b16 %v287
    %v312 = vpack.c.b16 %v296, %v296
    %v313 = vpack.c.b16 %v297, %v297
    %v314 = vpack.c.b16 %v298, %v298
    %v315 = vpack.c.b16 %v299, %v299
    %v316 = vpack.c.b16 %v300, %v300
    %v317 = vpack.c.b16 %v301, %v301
    %v318 = vpack.c.b16 %v302, %v302
    %v319 = vpack.c.b16 %v303, %v303
    %v320 = vpack.c.b16 %v304, %v304
    %v321 = vpack.c.b16 %v305, %v305
    %v322 = vpack.c.b16 %v306, %v306
    %v323 = vpack.c.b16 %v307, %v307
    %v324 = vpack.c.b16 %v308, %v308
    %v325 = vpack.c.b16 %v309, %v309
    %v326 = vpack.c.b16 %v310, %v310
    %v327 = vpack.c.b16 %v311, %v311
    %344 = vst [vmem:[#allocation4] sm:$0xf] %v312
    %345 = vst [vmem:[#allocation4 + $0x4] sm:$0xf] %v313
    %346 = vst [vmem:[#allocation4 + $0x8] sm:$0xf] %v314
    %347 = vst [vmem:[#allocation4 + $0xc] sm:$0xf] %v315
    %348 = vst [vmem:[#allocation4 + $0x10] sm:$0xf] %v316
    %349 = vst [vmem:[#allocation4 + $0x14] sm:$0xf] %v317
    %350 = vst [vmem:[#allocation4 + $0x18] sm:$0xf] %v318
    %351 = vst [vmem:[#allocation4 + $0x1c] sm:$0xf] %v319
    %352 = vst [vmem:[#allocation4 + $0x20] sm:$0xf] %v320
    %353 = vst [vmem:[#allocation4 + $0x24] sm:$0xf] %v321
    %354 = vst [vmem:[#allocation4 + $0x28] sm:$0xf] %v322
    %355 = vst [vmem:[#allocation4 + $0x2c] sm:$0xf] %v323
    %356 = vst [vmem:[#allocation4 + $0x30] sm:$0xf] %v324
    %357 = vst [vmem:[#allocation4 + $0x34] sm:$0xf] %v325
    %358 = vst [vmem:[#allocation4 + $0x38] sm:$0xf] %v326
    %359 = vst [vmem:[#allocation4 + $0x3c] sm:$0xf] %v327
    // Predicated region
    $region14: #{tpu_custom_call.1} parent=1 // pred_check
      _
    $region15: #{tpu_custom_call.1} parent=1 // pred_check_branch
      %361 = sbr.rel (0) target = $region17
    $region16: #{tpu_custom_call.1} parent=1 // pred_region
      %s363 = ssub.s32 2048, 2048
      %364 = vsyncadd [#allocation3], %s363
      %s365 = sshll.u32 [#allocation2], 4
      %s366 = int_to_ptr.vmem [resolvable:$true] %s365
      %371 = dma.vmem_to_hbm [thread:$0]  %s366, 2048, %s3, [#allocation3], 128, 128, 8
    $region17: #{tpu_custom_call.1} parent=1 // pred_fallthru
      _
    // Predicated region
    $region18: #{tpu_custom_call.1} parent=1 // pred_check
      _
    $region19: #{tpu_custom_call.1} parent=1 // pred_check_branch
      %373 = sbr.rel (0) target = $region21
    $region20: #{tpu_custom_call.1} parent=1 // pred_region
      %s375 = ssub.s32 1024, 1024
      %376 = vsyncadd [#allocation5], %s375
      %s377 = sshll.u32 [#allocation4], 4
      %s378 = int_to_ptr.vmem [resolvable:$true] %s377
      %383 = dma.vmem_to_hbm [thread:$0]  %s378, 1024, %s4, [#allocation5], 64, 64, 4
    $region21: #{tpu_custom_call.1} parent=1 // pred_fallthru
      _
    // Predicated region
    $region22: #{tpu_custom_call.1} parent=1 // pred_check
      _
    $region23: #{tpu_custom_call.1} parent=1 // pred_check_branch
      %385 = sbr.rel (0) target = $region25
    $region24: #{tpu_custom_call.1} parent=1 // pred_region
      %386 = dma.done [#allocation3], 2048
    $region25: #{tpu_custom_call.1} parent=1 // pred_fallthru
      _
    // Predicated region
    $region26: #{tpu_custom_call.1} parent=1 // pred_check
      _
    $region27: #{tpu_custom_call.1} parent=1 // pred_check_branch
      %388 = sbr.rel (0) target = $region29
    $region28: #{tpu_custom_call.1} parent=1 // pred_region
      %389 = dma.done [#allocation5], 1024
    $region29: #{tpu_custom_call.1} parent=1 // pred_fallthru
      _
    %390 = vsyncpa [#allocation3], 1
    %391 = vsyncpa [#allocation5], 1

</llo_original>
